<compile_context>
chip_gen: v5e
topology: v5e:2x2
jax: 0.10.0
libtpu: 0.0.40
codegen_flags: <defaults>
</compile_context>

<pallas_src>
import functools
import math

import jax
import jax.numpy as jnp
from jax.experimental import pallas as pl
from jax.experimental.pallas import tpu as pltpu

TM_MAX = 256
TN_MAX = 256
# Raises v5e's 16 MiB scoped default; at or below v6e/v7x defaults (32 MiB),
# and well within v7x's 64 MiB physical VMEM.  Largest tile set used here
# (layer4: 16x4608 x, 4608x256 w, double-buffered) is ~5 MiB.
VMEM_LIMIT_BYTES = 32 * 1024 * 1024


# ----------------------------------------------------------------------------
# Pallas kernels
# ----------------------------------------------------------------------------
def _matmul_affine_1k_kernel(*refs, activation, has_residual):
    """Single-K-step: o = act((x @ w) * scale + bias [+ residual]). No scratch."""
    if has_residual:
        x_ref, w_ref, s_ref, b_ref, r_ref, o_ref = refs
    else:
        x_ref, w_ref, s_ref, b_ref, o_ref = refs
        r_ref = None
    y = jnp.dot(x_ref[...], w_ref[...], preferred_element_type=jnp.float32)
    y = y * s_ref[...] + b_ref[...]
    if r_ref is not None:
        y = y + r_ref[...].astype(jnp.float32)
    if activation == "relu":
        y = jnp.maximum(y, 0.0)
    elif activation == "tanh":
        y = jnp.tanh(y)
    elif activation == "sigmoid":
        y = jax.nn.sigmoid(y)
    o_ref[...] = y.astype(o_ref.dtype)


def _matmul_affine_kernel(*refs, activation, has_residual):
    """Multi-K-step: K-accumulated in f32 scratch (used when K grid > 1)."""
    if has_residual:
        x_ref, w_ref, s_ref, b_ref, r_ref, o_ref, acc_ref = refs
    else:
        x_ref, w_ref, s_ref, b_ref, o_ref, acc_ref = refs
        r_ref = None

    @pl.when(pl.program_id(2) == 0)
    def _():
        acc_ref[...] = jnp.zeros_like(acc_ref)

    acc_ref[...] += jnp.dot(x_ref[...], w_ref[...],
                            preferred_element_type=jnp.float32)

    @pl.when(pl.program_id(2) == pl.num_programs(2) - 1)
    def _():
        y = acc_ref[...] * s_ref[...] + b_ref[...]
        if r_ref is not None:
            y = y + r_ref[...].astype(jnp.float32)
        if activation == "relu":
            y = jnp.maximum(y, 0.0)
        elif activation == "tanh":
            y = jnp.tanh(y)
        elif activation == "sigmoid":
            y = jax.nn.sigmoid(y)
        o_ref[...] = y.astype(o_ref.dtype)


def _maxpool_kernel(a_ref, b_ref, c_ref, d_ref, o_ref):
    """3x3/stride-2/pad-1 maxpool from even/odd phase planes (bf16, max exact).

    a[n,i,j] = xpad[n,2i,  2j]   b[n,i,j] = xpad[n,2i,  2j+1]
    c[n,i,j] = xpad[n,2i+1,2j]   d[n,i,j] = xpad[n,2i+1,2j+1]
    """
    a, b, c, d = a_ref[...], b_ref[...], c_ref[...], d_ref[...]
    # column (W) reduction over cols {2j, 2j+1, 2j+2}
    col_e = jnp.maximum(jnp.maximum(a, b)[:, :, :-1, :], a[:, :, 1:, :])
    col_o = jnp.maximum(jnp.maximum(c, d)[:, :, :-1, :], c[:, :, 1:, :])
    # row (H) reduction over rows {2i, 2i+1, 2i+2}
    out = jnp.maximum(jnp.maximum(col_e[:, :-1], col_o[:, :-1]), col_e[:, 1:])
    o_ref[...] = out.astype(o_ref.dtype)


def _head_kernel(x_ref, fcw_ref, fcb_ref, l1w_ref, l1s_ref, l1b_ref,
                 l2w_ref, l2b_ref, logits_ref, prob_ref):
    """Fused: global-avg-pool -> fc logits ; Linear->BN1d->tanh->Linear->sigmoid."""
    feat = jnp.mean(x_ref[...].astype(jnp.float32), axis=1)      # (B, C)
    fb = feat.astype(jnp.bfloat16)
    logits = jnp.dot(fb, fcw_ref[...], preferred_element_type=jnp.float32)
    logits_ref[...] = logits + fcb_ref[...]
    h = jnp.dot(fb, l1w_ref[...], preferred_element_type=jnp.float32)
    h = jnp.tanh(h * l1s_ref[...] + l1b_ref[...]).astype(jnp.bfloat16)
    p = jnp.dot(h, l2w_ref[...], preferred_element_type=jnp.float32)
    prob_ref[...] = jax.nn.sigmoid(p + l2b_ref[...])


# ----------------------------------------------------------------------------
# Helpers
# ----------------------------------------------------------------------------
def _round_up(x, m):
    return (x + m - 1) // m * m


def _pad2(x, rows, cols):
    if x.shape == (rows, cols):
        return x
    return jnp.pad(x, ((0, rows - x.shape[0]), (0, cols - x.shape[1])))


# ----------------------------------------------------------------------------
# Matmul wrapper (pre-packed, pre-padded weights)
# ----------------------------------------------------------------------------
def matmul_affine(x, w, scale, bias, n_out, activation=None, residual=None,
                  out_dtype=jnp.bfloat16):
    """act((x @ w) * scale + bias [+ residual]).

    x: (M, K) unpadded. w/scale/bias: pre-packed, shapes (Kp, Np)/(1, Np)/(1, Np)
    with Kp >= K and Np a multiple of 128.  Output sliced back to (M, n_out).
    """
    M, K = x.shape
    Kp, Np = w.shape
    assert Kp >= K and Np % 128 == 0

    sub = 16 if x.dtype == jnp.bfloat16 else 8   # sublane alignment
    TM = min(TM_MAX, _round_up(M, sub))
    Mp = _round_up(M, TM)
    TN = min(TN_MAX, Np)

    # collapse the K grid entirely for small-M layers (layer3/layer4) and
    # whenever K fits a single step; otherwise pick a dividing K tile.
    if Kp <= 1536 or TM <= 64:
        TK = Kp
    else:
        TK = next(t for t in (512, 256, 128) if Kp % t == 0)

    # v7x megacore: guarantee >= 2 blocks along a "parallel" axis when possible
    if Mp // TM == 1 and Np // TN == 1:
        if TN >= 256:
            TN //= 2
        elif TM >= 2 * sub and (TM // 2) % sub == 0:
            TM //= 2
            Mp = _round_up(M, TM)

    xp = _pad2(x, Mp, Kp)
    args = [xp, w, scale, bias]
    has_res = residual is not None
    if has_res:
        args.append(_pad2(residual, Mp, Np))

    nk = Kp // TK
    if nk == 1:
        kernel = functools.partial(_matmul_affine_1k_kernel,
                                   activation=activation, has_residual=has_res)
        in_specs = [
            pl.BlockSpec((TM, TK), lambda i, j: (i, 0)),
            pl.BlockSpec((TK, TN), lambda i, j: (0, j)),
            pl.BlockSpec((1, TN), lambda i, j: (0, j)),
            pl.BlockSpec((1, TN), lambda i, j: (0, j)),
        ]
        if has_res:
            in_specs.append(pl.BlockSpec((TM, TN), lambda i, j: (i, j)))
        out = pl.pallas_call(
            kernel,
            out_shape=jax.ShapeDtypeStruct((Mp, Np), out_dtype),
            grid_spec=pltpu.PrefetchScalarGridSpec(
                num_scalar_prefetch=0,
                grid=(Mp // TM, Np // TN),
                in_specs=in_specs,
                out_specs=pl.BlockSpec((TM, TN), lambda i, j: (i, j)),
            ),
            compiler_params=pltpu.CompilerParams(
                dimension_semantics=("parallel", "parallel"),
                vmem_limit_bytes=VMEM_LIMIT_BYTES),
        )(*args)
    else:
        kernel = functools.partial(_matmul_affine_kernel,
                                   activation=activation, has_residual=has_res)
        in_specs = [
            pl.BlockSpec((TM, TK), lambda i, j, k: (i, k)),
            pl.BlockSpec((TK, TN), lambda i, j, k: (k, j)),
            pl.BlockSpec((1, TN), lambda i, j, k: (0, j)),
            pl.BlockSpec((1, TN), lambda i, j, k: (0, j)),
        ]
        if has_res:
            in_specs.append(pl.BlockSpec((TM, TN), lambda i, j, k: (i, j)))
        out = pl.pallas_call(
            kernel,
            out_shape=jax.ShapeDtypeStruct((Mp, Np), out_dtype),
            grid_spec=pltpu.PrefetchScalarGridSpec(
                num_scalar_prefetch=0,
                grid=(Mp // TM, Np // TN, nk),
                in_specs=in_specs,
                out_specs=pl.BlockSpec((TM, TN), lambda i, j, k: (i, j)),
                scratch_shapes=[pltpu.VMEM((TM, TN), jnp.float32)],
            ),
            compiler_params=pltpu.CompilerParams(
                dimension_semantics=("parallel", "parallel", "arbitrary"),
                vmem_limit_bytes=VMEM_LIMIT_BYTES),
        )(*args)

    if Mp != M or Np != n_out:
        out = out[:M, :n_out]
    return out


# ----------------------------------------------------------------------------
# Conv / pool / head wrappers
# ----------------------------------------------------------------------------
def im2col(x, kh, kw, stride, pad):
    """x: (N,H,W,C) -> patches (N*Ho*Wo, kh*kw*C) in x.dtype."""
    N, H, W, C = x.shape
    xp = jnp.pad(x, ((0, 0), (pad, pad), (pad, pad), (0, 0)))
    Ho = (H + 2 * pad - kh) // stride + 1
    Wo = (W + 2 * pad - kw) // stride + 1
    cols = [xp[:, i:i + stride * Ho:stride, j:j + stride * Wo:stride, :]
            for i in range(kh) for j in range(kw)]
    cols = jnp.stack(cols, axis=3)  # (N, Ho, Wo, kh*kw, C)
    return cols.reshape(N * Ho * Wo, kh * kw * C), Ho, Wo


def conv_bn(x, p, activation=None, residual=None):
    """Conv2d (no bias) + folded BatchNorm + optional fused residual/activation."""
    patches, Ho, Wo = im2col(x, p["kh"], p["kw"], p["stride"], p["pad"])
    res2d = residual.reshape(-1, p["cout"]) if residual is not None else None
    out = matmul_affine(patches, p["w"], p["s"], p["b"], p["cout"],
                        activation=activation, residual=res2d,
                        out_dtype=x.dtype)
    return out.reshape(x.shape[0], Ho, Wo, p["cout"])


def maxpool2d_3x3_s2(x):
    """3x3 maxpool, stride 2, pad 1 (requires even H, W)."""
    N, H, W, C = x.shape
    assert H % 2 == 0 and W % 2 == 0
    Ho, Wo = H // 2, W // 2
    xp = jnp.pad(x, ((0, 0), (1, 1), (1, 1), (0, 0)),
                 constant_values=-jnp.inf)
    # even/odd phase split: exactly 1x the padded data, prepared once by XLA.
    q = xp.reshape(N, Ho + 1, 2, Wo + 1, 2, C)
    a = q[:, :, 0, :, 0, :]
    b = q[:, :, 0, :, 1, :]
    c = q[:, :, 1, :, 0, :]
    d = q[:, :, 1, :, 1, :]
    in_spec = pl.BlockSpec((1, Ho + 1, Wo + 1, C), lambda n: (n, 0, 0, 0))
    return pl.pallas_call(
        _maxpool_kernel,
        out_shape=jax.ShapeDtypeStruct((N, Ho, Wo, C), x.dtype),
        grid=(N,),
        in_specs=[in_spec, in_spec, in_spec, in_spec],
        out_specs=pl.BlockSpec((1, Ho, Wo, C), lambda n: (n, 0, 0, 0)),
        compiler_params=pltpu.CompilerParams(
            dimension_semantics=("parallel",)),
    )(a, b, c, d)


def fused_head(x, hp):
    """Global-avg-pool + linear classifier + proba MLP head in one Pallas call."""
    N, H, W, C = x.shape
    Bp = _round_up(N, 8)
    x2 = x.reshape(N, H * W, C)
    if Bp != N:
        x2 = jnp.pad(x2, ((0, Bp - N), (0, 0), (0, 0)))
    logits, prob = pl.pallas_call(
        _head_kernel,
        out_shape=(jax.ShapeDtypeStruct((Bp, hp["fc_w"].shape[1]), jnp.float32),
                   jax.ShapeDtypeStruct((Bp, hp["l2_w"].shape[1]), jnp.float32)),
    )(x2, hp["fc_w"], hp["fc_b"], hp["l1_w"], hp["l1_s"], hp["l1_b"],
      hp["l2_w"], hp["l2_b"])
    return logits[:N, :hp["num_classes"]], prob[:N, :hp["n_prob"]]


# ----------------------------------------------------------------------------
# Parameter init (ResNet18 shapes, num_classes=200) and one-time packing
# ----------------------------------------------------------------------------
def init_params(key, num_classes=200):
    keys = iter(jax.random.split(key, 256))

    def conv(cout, cin, kh, kw):
        fan_in = cin * kh * kw
        return jax.random.normal(next(keys), (cout, cin, kh, kw),
                                 jnp.float32) * math.sqrt(2.0 / fan_in)

    def bn(c):
        gamma = 1.0 + 0.1 * jax.random.normal(next(keys), (c,), jnp.float32)
        beta = 0.1 * jax.random.normal(next(keys), (c,), jnp.float32)
        mean = 0.1 * jax.random.normal(next(keys), (c,), jnp.float32)
        var = 1.0 + 0.1 * jnp.abs(jax.random.normal(next(keys), (c,), jnp.float32))
        return (gamma, beta, mean, var)

    def lin(out_f, in_f):
        w = jax.random.normal(next(keys), (out_f, in_f),
                              jnp.float32) * math.sqrt(2.0 / in_f)  # He init
        b = jnp.zeros((out_f,), jnp.float32)
        return (w, b)

    params = {"conv1": conv(64, 3, 7, 7), "bn1": bn(64)}
    in_c = 64
    for li, (out_c, stride) in enumerate(zip([64, 128, 256, 512],
                                             [1, 2, 2, 2]), start=1):
        blocks = []
        for bi in range(2):  # resnet18: 2 BasicBlocks per layer
            s = stride if bi == 0 else 1
            blk = {
                "stride": s,
                "conv1": conv(out_c, in_c, 3, 3), "bn1": bn(out_c),
                "conv2": conv(out_c, out_c, 3, 3), "bn2": bn(out_c),
            }
            if s != 1 or in_c != out_c:
                blk["ds_conv"] = conv(out_c, in_c, 1, 1)
                blk["ds_bn"] = bn(out_c)
            blocks.append(blk)
            in_c = out_c
        params[f"layer{li}"] = blocks

    params["fc"] = lin(num_classes, 512)          # classifier head (linear)
    params["proba_l1"] = lin(512, 512)            # MLPHead: Linear
    params["proba_bn"] = bn(512)                  #          BatchNorm1d
    params["proba_l2"] = lin(3, 512)              #          Linear -> 3
    return params


def prepare_params(params):
    """One-time weight packing: transpose/cast/pad everything to tile layout."""
    def pack_conv(conv_w, bn, stride, pad):
        Cout, Cin, kh, kw = conv_w.shape
        K = kh * kw * Cin
        Kp = K if (K % 128 == 0 or (K % 16 == 0 and K < 128)) else _round_up(K, 128)
        Np = _round_up(Cout, 128)                 # lane-dense (>=128) outputs
        wmat = jnp.transpose(conv_w, (2, 3, 1, 0)).reshape(K, Cout)
        gamma, beta, mean, var = bn
        s = gamma / jnp.sqrt(var + 1e-5)
        b = beta - mean * s
        return {"w": _pad2(wmat, Kp, Np).astype(jnp.bfloat16),
                "s": _pad2(s.reshape(1, -1), 1, Np),
                "b": _pad2(b.reshape(1, -1), 1, Np),
                "kh": kh, "kw": kw, "stride": stride, "pad": pad, "cout": Cout}

    packed = {"conv1": pack_conv(params["conv1"], params["bn1"], 2, 3)}
    for li in range(1, 5):
        blocks = []
        for blk in params[f"layer{li}"]:
            s = blk["stride"]
            pb = {"conv1": pack_conv(blk["conv1"], blk["bn1"], s, 1),
                  "conv2": pack_conv(blk["conv2"], blk["bn2"], 1, 1)}
            if "ds_conv" in blk:
                pb["ds"] = pack_conv(blk["ds_conv"], blk["ds_bn"], s, 0)
            blocks.append(pb)
        packed[f"layer{li}"] = blocks

    # heads (bf16 operands, f32 epilogue), padded to 128-lane outputs
    fc_w, fc_b = params["fc"]
    nc = fc_w.shape[0]
    ncp = _round_up(nc, 128)
    l1w, l1b = params["proba_l1"]
    g, bb, m, v = params["proba_bn"]
    s1 = g / jnp.sqrt(v + 1e-5)
    t1 = bb - m * s1
    l2w, l2b = params["proba_l2"]
    npb = l2w.shape[0]
    npp = _round_up(npb, 128)
    packed["head"] = {
        "fc_w": _pad2(fc_w.T, fc_w.shape[1], ncp).astype(jnp.bfloat16),
        "fc_b": _pad2(fc_b.reshape(1, -1), 1, ncp),
        "l1_w": l1w.T.astype(jnp.bfloat16),
        "l1_s": s1.reshape(1, -1),
        "l1_b": (l1b * s1 + t1).reshape(1, -1),
        "l2_w": _pad2(l2w.T, l2w.shape[1], npp).astype(jnp.bfloat16),
        "l2_b": _pad2(l2b.reshape(1, -1), 1, npp),
        "num_classes": nc, "n_prob": npb,
    }
    return packed


# ----------------------------------------------------------------------------
# Forward pass
# ----------------------------------------------------------------------------
def basic_block(x, blk):
    out = conv_bn(x, blk["conv1"], activation="relu")
    sc = conv_bn(x, blk["ds"], activation=None) if "ds" in blk else x
    # second conv with the residual add + ReLU fused into its epilogue
    return conv_bn(out, blk["conv2"], activation="relu", residual=sc)


def resnet_forward(packed, x_nchw):
    # NCHW -> NHWC, bf16 activations through the backbone (f32 accumulation)
    x = jnp.transpose(x_nchw.astype(jnp.float32), (0, 2, 3, 1)).astype(jnp.bfloat16)

    # backbone: conv1 / bn1 / relu / maxpool / layer1..layer4
    x = conv_bn(x, packed["conv1"], activation="relu")
    x = maxpool2d_3x3_s2(x)
    for li in range(1, 5):
        for blk in packed[f"layer{li}"]:
            x = basic_block(x, blk)

    # neck (GAP) + classifier head + proba head, fused into one Pallas call
    logits, prob = fused_head(x, packed["head"])
    return {"logits": logits, "prob": prob}


# ----------------------------------------------------------------------------
if __name__ == "__main__":
    key = jax.random.PRNGKey(0)
    pkey, xkey = jax.random.split(key)
    params = init_params(pkey, num_classes=200)
    packed = prepare_params(params)   # one-time weight packing (bf16, padded)

    # small deterministic input (N=2, C=3, H=W=64) in PyTorch NCHW layout
    x = jax.random.normal(xkey, (2, 3, 64, 64), jnp.float32)

    out = resnet_forward(packed, x)
    out = jax.tree_util.tree_map(jax.block_until_ready, out)

    assert out["logits"].shape == (2, 200), out["logits"].shape
    assert out["prob"].shape == (2, 3), out["prob"].shape
    assert bool(jnp.all(jnp.isfinite(out["logits"])))
    assert bool(jnp.all((out["prob"] >= 0.0) & (out["prob"] <= 1.0)))
    print("KERNEL_OK")
</pallas_src>

<mosaic_0001>
module attributes {stable_mosaic.version = 11 : i64} {
  func.func @_matmul_affine_1k_kernel(%arg0: i32, %arg1: i32, %arg2: memref<256x256xbf16, #tpu.memory_space<vmem>>, %arg3: memref<256x128xbf16, #tpu.memory_space<vmem>>, %arg4: memref<1x128xf32, #tpu.memory_space<vmem>>, %arg5: memref<1x128xf32, #tpu.memory_space<vmem>>, %arg6: memref<256x128xbf16, #tpu.memory_space<vmem>>) attributes {dimension_semantics = [#tpu.dimension_semantics<parallel>, #tpu.dimension_semantics<parallel>], iteration_bounds = array<i64: 8, 1>, scalar_prefetch = 0 : i64, scratch_operands = 0 : i64, tpu.core_type = #tpu.core_type<tc>, window_params = [{transform_indices = @transform_0, window_bounds = array<i64: 256, 256>}, {transform_indices = @transform_1, window_bounds = array<i64: 256, 128>}, {transform_indices = @transform_2, window_bounds = array<i64: 1, 128>}, {transform_indices = @transform_3, window_bounds = array<i64: 1, 128>}, {transform_indices = @transform_4, window_bounds = array<i64: 256, 128>}]} {
    %c0 = arith.constant 0 : index
    %c0_0 = arith.constant 0 : index
    %0 = vector.load %arg2[%c0, %c0_0] : memref<256x256xbf16, #tpu.memory_space<vmem>>, vector<256x256xbf16>
    %c0_1 = arith.constant 0 : index
    %c0_2 = arith.constant 0 : index
    %1 = vector.load %arg3[%c0_1, %c0_2] : memref<256x128xbf16, #tpu.memory_space<vmem>>, vector<256x128xbf16>
    %cst = arith.constant dense<0.000000e+00> : vector<256x128xf32>
    %2 = tpu.matmul %0, %1, %cst {dimension_numbers = #tpu.dot_dimension_numbers<[1], [0], [0], [1], [0, 0, 1, 1], [], []>} : vector<256x256xbf16>, vector<256x128xbf16>, vector<256x128xf32> -> vector<256x128xf32>
    %c0_3 = arith.constant 0 : index
    %c0_4 = arith.constant 0 : index
    %3 = vector.load %arg4[%c0_3, %c0_4] : memref<1x128xf32, #tpu.memory_space<vmem>>, vector<1x128xf32>
    %4 = vector.broadcast %3 : vector<1x128xf32> to vector<256x128xf32>
    %5 = arith.mulf %2, %4 : vector<256x128xf32>
    %c0_5 = arith.constant 0 : index
    %c0_6 = arith.constant 0 : index
    %6 = vector.load %arg5[%c0_5, %c0_6] : memref<1x128xf32, #tpu.memory_space<vmem>>, vector<1x128xf32>
    %7 = vector.broadcast %6 : vector<1x128xf32> to vector<256x128xf32>
    %8 = arith.addf %5, %7 : vector<256x128xf32>
    %cst_7 = arith.constant 0.000000e+00 : f32
    %9 = vector.broadcast %cst_7 : f32 to vector<256x128xf32>
    %10 = arith.maximumf %8, %9 : vector<256x128xf32>
    %11 = arith.truncf %10 : vector<256x128xf32> to vector<256x128xbf16>
    %c0_8 = arith.constant 0 : index
    %c0_9 = arith.constant 0 : index
    %12 = vector.load %arg6[%c0_8, %c0_9] : memref<256x128xbf16, #tpu.memory_space<vmem>>, vector<256x128xbf16>
    tpu.vector_store %arg6[%c0_8, %c0_9], %11 {strides = array<i32>} : memref<256x128xbf16, #tpu.memory_space<vmem>>, vector<256x128xbf16>,
    return
  }
  func.func @transform_0(%arg0: i32, %arg1: i32) -> (i32, i32) {
    %c0_i32 = arith.constant 0 : i32
    %c0_i32_0 = arith.constant 0 : i32
    return %arg0, %c0_i32 : i32, i32
  }
  func.func @transform_1(%arg0: i32, %arg1: i32) -> (i32, i32) {
    %c0_i32 = arith.constant 0 : i32
    %c0_i32_0 = arith.constant 0 : i32
    return %c0_i32, %arg1 : i32, i32
  }
  func.func @transform_2(%arg0: i32, %arg1: i32) -> (i32, i32) {
    %c0_i32 = arith.constant 0 : i32
    %c0_i32_0 = arith.constant 0 : i32
    return %c0_i32, %arg1 : i32, i32
  }
  func.func @transform_3(%arg0: i32, %arg1: i32) -> (i32, i32) {
    %c0_i32 = arith.constant 0 : i32
    %c0_i32_0 = arith.constant 0 : i32
    return %c0_i32, %arg1 : i32, i32
  }
  func.func @transform_4(%arg0: i32, %arg1: i32) -> (i32, i32) {
    %c0_i32 = arith.constant 0 : i32
    return %arg0, %arg1 : i32, i32
  }
}

</mosaic_0001>

<llo_original>
// kernel: tpu_custom_call.1
$region0: #{tpu_custom_call.1}
  #allocation0 [shape = 'u32[]', space=smem, size = 0x4, offset = 0x4, fixed_abs, tag = 'smem constant byte address 0x4 - core index']
  #allocation1 [shape = 'u32[72,128]{1,0:T(1,128)}', space=vmem, size = 0x9000, scoped, tag = 'internal scratch']
  %s0 = inlined_call_operand.hbm [shape: bf16[2048,256], index: 0, kind: input, shape index: {}]
  %s1 = inlined_call_operand.hbm [shape: bf16[256,128], index: 1, kind: input, shape index: {}]
  %s2 = inlined_call_operand.vmem [shape: f32[1,128], index: 2, kind: input, shape index: {}]
  %s3 = inlined_call_operand.vmem [shape: f32[1,128], index: 3, kind: input, shape index: {}]
  %s4 = inlined_call_operand.hbm [shape: bf16[2048,128], index: 4, kind: output, shape index: {}]
  %s5 = sld [smem:[#allocation0]]
  $region57: #{tpu_custom_call.1} parent=0
    _
  %s7 = ssub.s32 1, %s5
  %s8 = scalar_select 0, %s7, %s5
  $region1: #{tpu_custom_call.1} parent=0
    #allocation2 [shape = 'u8[262144]{0}', space=vmem, size = 0x40000, scoped, tag = 'input window, operand 0']
    #allocation3 [shape = 's32[2]{0}', space=sflag, size = 0x8, scoped, tag = 'scoped memory for tpu_custom_call.1']
    #allocation4 [shape = 's32[2]{0}', space=sflag, size = 0x8, scoped, tag = 'scoped memory for tpu_custom_call.1']
    #allocation5 [shape = 'u8[65536]{0}', space=vmem, size = 0x10000, scoped, tag = 'input window, operand 1, single buffered']
    #allocation6 [shape = 's32[1]{0}', space=sflag, size = 0x4, scoped, tag = 'scoped memory for tpu_custom_call.1']
    #allocation7 [shape = 'u8[131072]{0}', space=vmem, size = 0x20000, scoped, tag = 'output window, operand 0']
    %9 = vsyncpa [#allocation3], 0
    %s10 = scalar_lea.sflag [#allocation3], 1
    %11 = vsyncpa %s10, 0
    %12 = vsyncpa [#allocation6], 0
    %13 = vsyncpa [#allocation4], 0
    %s14 = scalar_lea.sflag [#allocation4], 1
    %15 = vsyncpa %s14, 0
    loop: start=0, step=1, limit=10
    $region2: #{tpu_custom_call.1} parent=1 // loop_pre_header
      _
    $region3: #{tpu_custom_call.1} parent=1 // loop_header
      %s17 = sphi 0, %s21
      %p18 = scmp.ge.s32.totalorder %s17, 10
      %s24 = sphi 0, %s36
      %s25 = sphi 0, %s32
      %s26 = sphi 0, %s24
      %s27 = sphi 0, %s25
      %s28 = sphi 0, %s26
      %s29 = sphi 0, %s27
      %s39 = sphi 0, %s41
      %s42 = sphi 0, %s39
      %s43 = sphi 0, %s42
      %s59 = sphi 0, %s43
      %s65 = sphi 0, %s67
      %s68 = sphi 0, %s65
      %s69 = sphi 0, %s68
      %s85 = sphi 0, %s69
      %s91 = sphi 0, %s93
      %s94 = sphi 0, %s91
      %s95 = sphi 0, %s94
      %s111 = sphi 0, %s95
      %s117 = sphi 0, %s119
      %s120 = sphi 0, %s117
      %s121 = sphi 0, %s120
      %s137 = sphi 0, %s121
      %s145 = sphi 0, %s147
      %s148 = sphi 0, %s145
      %s149 = sphi 0, %s148
      %s165 = sphi 0, %s149
    $region4: #{tpu_custom_call.1} parent=1 // loop_header_branch
      %20 = sbr.rel (%p18) target = $region8
    $region5: #{tpu_custom_call.1} parent=1 // loop_body
      %s22 = ssub.s32 %s17, 1
      %s23 = ssub.s32 %s17, 2
      %s30 = sadd.s32 1, %s25
      %p31 = scmp.ge.s32.totalorder %s30, 1
      %s32 = scalar_select %p31, 0, %s30
      %s33 = sadd.s32 1, %s24
      %s34 = scalar_select %p31, %s33, %s24
      %p35 = scmp.ge.s32.totalorder %s34, 8
      %s36 = scalar_select %p35, 0, %s34
      %s37 = ssub.s32 %s24, %s36
      %p38 = scmp.eq.s32.totalorder %s37, 0
      %s40 = sadd.s32 %s39, 1
      %s41 = scalar_select %p38, %s39, %s40
      %p44 = pneg %p38
      %p45 = scmp.eq.s32.totalorder %s17, 7
      %p46 = por %p44, %p45
      %p47 = scmp.ne.s32.totalorder %s39, %s42
      %p48 = scmp.eq.s32.totalorder %s17, 0
      %p49 = por %p47, %p48
      %p50 = scmp.ne.s32.totalorder %s39, %s42
      %p51 = scmp.eq.s32.totalorder %s22, 7
      %p52 = por %p50, %p51
      %p53 = scmp.ne.s32.totalorder %s42, %s43
      %p54 = scmp.eq.s32.totalorder %s22, 0
      %p55 = por %p53, %p54
      %p56 = scmp.ne.s32.totalorder %s42, %s43
      %p57 = scmp.eq.s32.totalorder %s23, 7
      %p58 = por %p56, %p57
      %p60 = scmp.ne.s32.totalorder %s43, %s59
      %p61 = scmp.eq.s32.totalorder %s23, 0
      %p62 = por %p60, %p61
      %s63 = ssub.s32 %s25, %s32
      %p64 = scmp.eq.s32.totalorder %s63, 0
      %s66 = sadd.s32 %s65, 1
      %s67 = scalar_select %p64, %s65, %s66
      %p70 = pneg %p64
      %p71 = scmp.eq.s32.totalorder %s17, 7
      %p72 = por %p70, %p71
      %p73 = scmp.ne.s32.totalorder %s65, %s68
      %p74 = scmp.eq.s32.totalorder %s17, 0
      %p75 = por %p73, %p74
      %p76 = scmp.ne.s32.totalorder %s65, %s68
      %p77 = scmp.eq.s32.totalorder %s22, 7
      %p78 = por %p76, %p77
      %p79 = scmp.ne.s32.totalorder %s68, %s69
      %p80 = scmp.eq.s32.totalorder %s22, 0
      %p81 = por %p79, %p80
      %p82 = scmp.ne.s32.totalorder %s68, %s69
      %p83 = scmp.eq.s32.totalorder %s23, 7
      %p84 = por %p82, %p83
      %p86 = scmp.ne.s32.totalorder %s69, %s85
      %p87 = scmp.eq.s32.totalorder %s23, 0
      %p88 = por %p86, %p87
      %s89 = ssub.s32 %s25, %s32
      %p90 = scmp.eq.s32.totalorder %s89, 0
      %s92 = sadd.s32 %s91, 1
      %s93 = scalar_select %p90, %s91, %s92
      %p96 = pneg %p90
      %p97 = scmp.eq.s32.totalorder %s17, 7
      %p98 = por %p96, %p97
      %p99 = scmp.ne.s32.totalorder %s91, %s94
      %p100 = scmp.eq.s32.totalorder %s17, 0
      %p101 = por %p99, %p100
      %p102 = scmp.ne.s32.totalorder %s91, %s94
      %p103 = scmp.eq.s32.totalorder %s22, 7
      %p104 = por %p102, %p103
      %p105 = scmp.ne.s32.totalorder %s94, %s95
      %p106 = scmp.eq.s32.totalorder %s22, 0
      %p107 = por %p105, %p106
      %p108 = scmp.ne.s32.totalorder %s94, %s95
      %p109 = scmp.eq.s32.totalorder %s23, 7
      %p110 = por %p108, %p109
      %p112 = scmp.ne.s32.totalorder %s95, %s111
      %p113 = scmp.eq.s32.totalorder %s23, 0
      %p114 = por %p112, %p113
      %s115 = ssub.s32 %s25, %s32
      %p116 = scmp.eq.s32.totalorder %s115, 0
      %s118 = sadd.s32 %s117, 1
      %s119 = scalar_select %p116, %s117, %s118
      %p122 = pneg %p116
      %p123 = scmp.eq.s32.totalorder %s17, 7
      %p124 = por %p122, %p123
      %p125 = scmp.ne.s32.totalorder %s117, %s120
      %p126 = scmp.eq.s32.totalorder %s17, 0
      %p127 = por %p125, %p126
      %p128 = scmp.ne.s32.totalorder %s117, %s120
      %p129 = scmp.eq.s32.totalorder %s22, 7
      %p130 = por %p128, %p129
      %p131 = scmp.ne.s32.totalorder %s120, %s121
      %p132 = scmp.eq.s32.totalorder %s22, 0
      %p133 = por %p131, %p132
      %p134 = scmp.ne.s32.totalorder %s120, %s121
      %p135 = scmp.eq.s32.totalorder %s23, 7
      %p136 = por %p134, %p135
      %p138 = scmp.ne.s32.totalorder %s121, %s137
      %p139 = scmp.eq.s32.totalorder %s23, 0
      %p140 = por %p138, %p139
      %s141 = ssub.s32 %s24, %s36
      %s142 = ssub.s32 %s25, %s32
      %s143 = sor.u32 %s141, %s142
      %p144 = scmp.eq.s32.totalorder %s143, 0
      %s146 = sadd.s32 %s145, 1
      %s147 = scalar_select %p144, %s145, %s146
      %p150 = pneg %p144
      %p151 = scmp.eq.s32.totalorder %s17, 7
      %p152 = por %p150, %p151
      %p153 = scmp.ne.s32.totalorder %s145, %s148
      %p154 = scmp.eq.s32.totalorder %s17, 0
      %p155 = por %p153, %p154
      %p156 = scmp.ne.s32.totalorder %s145, %s148
      %p157 = scmp.eq.s32.totalorder %s22, 7
      %p158 = por %p156, %p157
      %p159 = scmp.ne.s32.totalorder %s148, %s149
      %p160 = scmp.eq.s32.totalorder %s22, 0
      %p161 = por %p159, %p160
      %p162 = scmp.ne.s32.totalorder %s148, %s149
      %p163 = scmp.eq.s32.totalorder %s23, 7
      %p164 = por %p162, %p163
      %p166 = scmp.ne.s32.totalorder %s149, %s165
      %p167 = scmp.eq.s32.totalorder %s23, 0
      %p168 = por %p166, %p167
      %p169 = scmp.le.s32.totalorder 1, %s17
      %p170 = scmp.lt.s32.totalorder %s17, 9
      %p171 = pnand %p169, %p170
      %p172 = pneg %p171
      // Predicated region
      $region9: #{tpu_custom_call.1} parent=5 // pred_check
        _
      $region10: #{tpu_custom_call.1} parent=5 // pred_check_branch
        %174 = sbr.rel (%p171) target = $region12
      $region11: #{tpu_custom_call.1} parent=5 // pred_region
        %s175 = ssub.s32 %s17, 1
        // Predicated region
        $region13: #{tpu_custom_call.1} parent=11 // pred_check
          %p176 = pneg %p81
        $region14: #{tpu_custom_call.1} parent=11 // pred_check_branch
          %178 = sbr.rel (%p176) target = $region16
        $region15: #{tpu_custom_call.1} parent=11 // pred_region
          %180 = vsyncadd [#allocation6], 0
          %s181 = smul.addr %s27, 4
          %s182 = scalar_lea.hbm %s1, %s181
          %s183 = sshll.u32 %s182, 4
          %s184 = int_to_ptr.hbm [resolvable:$true] %s183
          %s185 = sshll.u32 [#allocation5], 4
          %s186 = int_to_ptr.vmem [resolvable:$true] %s185
          %191 = dma.hbm_to_vmem [thread:$0]  %s184, 2048, %s186, [#allocation6], 64, 64, 4
        $region16: #{tpu_custom_call.1} parent=11 // pred_fallthru
          _
        // Predicated region
        $region17: #{tpu_custom_call.1} parent=11 // pred_check
          %p192 = pneg %p107
        $region18: #{tpu_custom_call.1} parent=11 // pred_check_branch
          %194 = sbr.rel (%p192) target = $region20
        $region19: #{tpu_custom_call.1} parent=11 // pred_region
          %p195 = scmp.lt.s32.totalorder %s27, 0
          %s196 = scalar_select %p195, %s27, 0
          %s197 = scalar_lea.vmem %s2, %s196
        $region20: #{tpu_custom_call.1} parent=11 // pred_fallthru
          _
        // Predicated region
        $region21: #{tpu_custom_call.1} parent=11 // pred_check
          %p198 = pneg %p133
        $region22: #{tpu_custom_call.1} parent=11 // pred_check_branch
          %200 = sbr.rel (%p198) target = $region24
        $region23: #{tpu_custom_call.1} parent=11 // pred_region
          %p201 = scmp.lt.s32.totalorder %s27, 0
          %s202 = scalar_select %p201, %s27, 0
          %s203 = scalar_lea.vmem %s3, %s202
        $region24: #{tpu_custom_call.1} parent=11 // pred_fallthru
          _
      $region12: #{tpu_custom_call.1} parent=5 // pred_fallthru
        _
      %p204 = scmp.lt.s32.totalorder %s17, 8
      // Predicated region
      $region25: #{tpu_custom_call.1} parent=5 // pred_check
        %p205 = pneg %p204
      $region26: #{tpu_custom_call.1} parent=5 // pred_check_branch
        %207 = sbr.rel (%p205) target = $region28
      $region27: #{tpu_custom_call.1} parent=5 // pred_region
        // Predicated region
        $region29: #{tpu_custom_call.1} parent=27 // pred_check
          %p208 = pneg %p49
        $region30: #{tpu_custom_call.1} parent=27 // pred_check_branch
          %210 = sbr.rel (%p208) target = $region32
        $region31: #{tpu_custom_call.1} parent=27 // pred_region
          %s211 = sand.u32 %s39, 1
          %s212 = scalar_lea.sflag [#allocation3], %s211
          %s213 = sand.u32 %s39, 1
          %s214 = smul.addr %s213, 256
          %s215 = scalar_lea.vmem [#allocation2], %s214
          %s216 = smul.u32 32, %s24
          %218 = vsyncadd %s212, 0
          %s219 = smul.addr %s216, 2
          %s220 = smul.addr %s219, 4
          %s221 = scalar_lea.hbm %s0, %s220
          %s222 = sshll.u32 %s221, 4
          %s223 = int_to_ptr.hbm [resolvable:$true] %s222
          %s224 = sshll.u32 %s215, 4
          %s225 = int_to_ptr.vmem [resolvable:$true] %s224
          %230 = dma.hbm_to_vmem [thread:$0]  %s223, 4096, %s225, %s212, 128, 128, 8
        $region32: #{tpu_custom_call.1} parent=27 // pred_fallthru
          _
      $region28: #{tpu_custom_call.1} parent=5 // pred_fallthru
        _
      %p231 = scmp.le.s32.totalorder 1, %s17
      %p232 = scmp.lt.s32.totalorder %s17, 9
      %p233 = pnand %p231, %p232
      %p234 = pneg %p233
      // Predicated region
      $region33: #{tpu_custom_call.1} parent=5 // pred_check
        _
      $region34: #{tpu_custom_call.1} parent=5 // pred_check_branch
        %236 = sbr.rel (%p233) target = $region36
      $region35: #{tpu_custom_call.1} parent=5 // pred_region
        %s237 = ssub.s32 %s17, 1
        %s238 = sand.u32 %s42, 1
        %s239 = scalar_lea.sflag [#allocation3], %s238
        %s240 = sand.u32 %s42, 1
        %s241 = smul.addr %s240, 256
        %s242 = scalar_lea.vmem [#allocation2], %s241
        // Predicated region
        $region37: #{tpu_custom_call.1} parent=35 // pred_check
          %p243 = pneg %p55
        $region38: #{tpu_custom_call.1} parent=35 // pred_check_branch
          %245 = sbr.rel (%p243) target = $region40
        $region39: #{tpu_custom_call.1} parent=35 // pred_region
          %247 = dma.done %s239, 4096
        $region40: #{tpu_custom_call.1} parent=35 // pred_fallthru
          _
        // Predicated region
        $region41: #{tpu_custom_call.1} parent=35 // pred_check
          %p248 = pneg %p81
        $region42: #{tpu_custom_call.1} parent=35 // pred_check_branch
          %250 = sbr.rel (%p248) target = $region44
        $region43: #{tpu_custom_call.1} parent=35 // pred_region
          %252 = dma.done [#allocation6], 2048
        $region44: #{tpu_custom_call.1} parent=35 // pred_fallthru
          _
        %s253 = sand.u32 %s42, 1
        %s254 = scalar_lea.sflag [#allocation3], %s253
        %s255 = sand.u32 %s42, 1
        %s256 = smul.addr %s255, 256
        %s257 = scalar_lea.vmem [#allocation2], %s256
        %p258 = pneg %p55
        %p259 = pneg %p52
        %p260 = pneg %p81
        %p261 = pneg %p78
        %p262 = scmp.lt.s32.totalorder %s27, 0
        %s263 = scalar_select %p262, %s27, 0
        %s264 = scalar_lea.vmem %s2, %s263
        %p265 = pneg %p107
        %p266 = pneg %p104
        %p267 = scmp.lt.s32.totalorder %s27, 0
        %s268 = scalar_select %p267, %s27, 0
        %s269 = scalar_lea.vmem %s3, %s268
        %p270 = pneg %p133
        %p271 = pneg %p130
        %p272 = pneg %p161
        %p273 = pneg %p158
        %s274 = sand.u32 %s148, 1
        %s275 = scalar_lea.sflag [#allocation4], %s274
        %s276 = sand.u32 %s148, 1
        %s277 = smul.addr %s276, 128
        %s278 = scalar_lea.vmem [#allocation7], %s277
        %s279 = smul.u32 32, %s26
        %p280 = scmp.lt.s32.totalorder %s27, 0
        %s281 = scalar_select %p280, %s27, 0
        %s282 = scalar_lea.vmem %s2, %s281
        %p283 = scmp.lt.s32.totalorder %s27, 0
        %s284 = scalar_select %p283, %s27, 0
        %s285 = scalar_lea.vmem %s3, %s284
        %s286 = smul.u32 32, %s26
        %v287 = vld [vmem:[%s242] sm:$0xff]
        %v288 = vld [vmem:[%s242 + $0x8] sm:$0xff]
        %v289 = vld [vmem:[%s242 + $0x10] sm:$0xff]
        %v290 = vld [vmem:[%s242 + $0x18] sm:$0xff]
        %v291 = vld [vmem:[%s242 + $0x20] sm:$0xff]
        %v292 = vld [vmem:[%s242 + $0x28] sm:$0xff]
        %v293 = vld [vmem:[%s242 + $0x30] sm:$0xff]
        %v294 = vld [vmem:[%s242 + $0x38] sm:$0xff]
        %v295 = vld [vmem:[%s242 + $0x40] sm:$0xff]
        %v296 = vld [vmem:[%s242 + $0x48] sm:$0xff]
        %v297 = vld [vmem:[%s242 + $0x50] sm:$0xff]
        %v298 = vld [vmem:[%s242 + $0x58] sm:$0xff]
        %v299 = vld [vmem:[%s242 + $0x60] sm:$0xff]
        %v300 = vld [vmem:[%s242 + $0x68] sm:$0xff]
        %v301 = vld [vmem:[%s242 + $0x70] sm:$0xff]
        %v302 = vld [vmem:[%s242 + $0x78] sm:$0xff]
        %v303 = vld [vmem:[%s242 + $0x80] sm:$0xff]
        %v304 = vld [vmem:[%s242 + $0x88] sm:$0xff]
        %v305 = vld [vmem:[%s242 + $0x90] sm:$0xff]
        %v306 = vld [vmem:[%s242 + $0x98] sm:$0xff]
        %v307 = vld [vmem:[%s242 + $0xa0] sm:$0xff]
        %v308 = vld [vmem:[%s242 + $0xa8] sm:$0xff]
        %v309 = vld [vmem:[%s242 + $0xb0] sm:$0xff]
        %v310 = vld [vmem:[%s242 + $0xb8] sm:$0xff]
        %v311 = vld [vmem:[%s242 + $0xc0] sm:$0xff]
        %v312 = vld [vmem:[%s242 + $0xc8] sm:$0xff]
        %v313 = vld [vmem:[%s242 + $0xd0] sm:$0xff]
        %v314 = vld [vmem:[%s242 + $0xd8] sm:$0xff]
        %v315 = vld [vmem:[%s242 + $0xe0] sm:$0xff]
        %v316 = vld [vmem:[%s242 + $0xe8] sm:$0xff]
        %v317 = vld [vmem:[%s242 + $0xf0] sm:$0xff]
        %v318 = vld [vmem:[%s242 + $0xf8] sm:$0xff]
        %v319 = vld [vmem:[#allocation5] sm:$0xf]
        %v320 = vld [vmem:[#allocation5 + $0x4] sm:$0xf]
        %v321 = vld [vmem:[#allocation5 + $0x8] sm:$0xf]
        %v322 = vld [vmem:[#allocation5 + $0xc] sm:$0xf]
        %v323 = vld [vmem:[#allocation5 + $0x10] sm:$0xf]
        %v324 = vld [vmem:[#allocation5 + $0x14] sm:$0xf]
        %v325 = vld [vmem:[#allocation5 + $0x18] sm:$0xf]
        %v326 = vld [vmem:[#allocation5 + $0x1c] sm:$0xf]
        %v327 = vld [vmem:[#allocation5 + $0x20] sm:$0xf]
        %v328 = vld [vmem:[#allocation5 + $0x24] sm:$0xf]
        %v329 = vld [vmem:[#allocation5 + $0x28] sm:$0xf]
        %v330 = vld [vmem:[#allocation5 + $0x2c] sm:$0xf]
        %v331 = vld [vmem:[#allocation5 + $0x30] sm:$0xf]
        %v332 = vld [vmem:[#allocation5 + $0x34] sm:$0xf]
        %v333 = vld [vmem:[#allocation5 + $0x38] sm:$0xf]
        %v334 = vld [vmem:[#allocation5 + $0x3c] sm:$0xf]
        %v335 = vld [vmem:[#allocation5 + $0x40] sm:$0xf]
        %v336 = vld [vmem:[#allocation5 + $0x44] sm:$0xf]
        %v337 = vld [vmem:[#allocation5 + $0x48] sm:$0xf]
        %v338 = vld [vmem:[#allocation5 + $0x4c] sm:$0xf]
        %v339 = vld [vmem:[#allocation5 + $0x50] sm:$0xf]
        %v340 = vld [vmem:[#allocation5 + $0x54] sm:$0xf]
        %v341 = vld [vmem:[#allocation5 + $0x58] sm:$0xf]
        %v342 = vld [vmem:[#allocation5 + $0x5c] sm:$0xf]
        %v343 = vld [vmem:[#allocation5 + $0x60] sm:$0xf]
        %v344 = vld [vmem:[#allocation5 + $0x64] sm:$0xf]
        %v345 = vld [vmem:[#allocation5 + $0x68] sm:$0xf]
        %v346 = vld [vmem:[#allocation5 + $0x6c] sm:$0xf]
        %v347 = vld [vmem:[#allocation5 + $0x70] sm:$0xf]
        %v348 = vld [vmem:[#allocation5 + $0x74] sm:$0xf]
        %v349 = vld [vmem:[#allocation5 + $0x78] sm:$0xf]
        %v350 = vld [vmem:[#allocation5 + $0x7c] sm:$0xf]
        %v383 = vunpack.c.l.b16 %v287
        %v384 = vunpack.c.h.b16 %v287
        %v385 = vunpack.c.l.b16 %v288
        %v386 = vunpack.c.h.b16 %v288
        %v387 = vunpack.c.l.b16 %v289
        %v388 = vunpack.c.h.b16 %v289
        %v389 = vunpack.c.l.b16 %v290
        %v390 = vunpack.c.h.b16 %v290
        %v391 = vunpack.c.l.b16 %v291
        %v392 = vunpack.c.h.b16 %v291
        %v393 = vunpack.c.l.b16 %v292
        %v394 = vunpack.c.h.b16 %v292
        %v395 = vunpack.c.l.b16 %v293
        %v396 = vunpack.c.h.b16 %v293
        %v397 = vunpack.c.l.b16 %v294
        %v398 = vunpack.c.h.b16 %v294
        %v399 = vunpack.c.l.b16 %v295
        %v400 = vunpack.c.h.b16 %v295
        %v401 = vunpack.c.l.b16 %v296
        %v402 = vunpack.c.h.b16 %v296
        %v403 = vunpack.c.l.b16 %v297
        %v404 = vunpack.c.h.b16 %v297
        %v405 = vunpack.c.l.b16 %v298
        %v406 = vunpack.c.h.b16 %v298
        %v407 = vunpack.c.l.b16 %v299
        %v408 = vunpack.c.h.b16 %v299
        %v409 = vunpack.c.l.b16 %v300
        %v410 = vunpack.c.h.b16 %v300
        %v411 = vunpack.c.l.b16 %v301
        %v412 = vunpack.c.h.b16 %v301
        %v413 = vunpack.c.l.b16 %v302
        %v414 = vunpack.c.h.b16 %v302
        %v415 = vunpack.c.l.b16 %v303
        %v416 = vunpack.c.h.b16 %v303
        %v417 = vunpack.c.l.b16 %v304
        %v418 = vunpack.c.h.b16 %v304
        %v419 = vunpack.c.l.b16 %v305
        %v420 = vunpack.c.h.b16 %v305
        %v421 = vunpack.c.l.b16 %v306
        %v422 = vunpack.c.h.b16 %v306
        %v423 = vunpack.c.l.b16 %v307
        %v424 = vunpack.c.h.b16 %v307
        %v425 = vunpack.c.l.b16 %v308
        %v426 = vunpack.c.h.b16 %v308
        %v427 = vunpack.c.l.b16 %v309
        %v428 = vunpack.c.h.b16 %v309
        %v429 = vunpack.c.l.b16 %v310
        %v430 = vunpack.c.h.b16 %v310
        %v431 = vunpack.c.l.b16 %v311
        %v432 = vunpack.c.h.b16 %v311
        %v433 = vunpack.c.l.b16 %v312
        %v434 = vunpack.c.h.b16 %v312
        %v435 = vunpack.c.l.b16 %v313
        %v436 = vunpack.c.h.b16 %v313
        %v437 = vunpack.c.l.b16 %v314
        %v438 = vunpack.c.h.b16 %v314
        %v439 = vunpack.c.l.b16 %v315
        %v440 = vunpack.c.h.b16 %v315
        %v441 = vunpack.c.l.b16 %v316
        %v442 = vunpack.c.h.b16 %v316
        %v443 = vunpack.c.l.b16 %v317
        %v444 = vunpack.c.h.b16 %v317
        %v445 = vunpack.c.l.b16 %v318
        %v446 = vunpack.c.h.b16 %v318
        %v447 = vpack.c.b16 %v385, %v383
        %v448 = vpack.c.b16 %v386, %v384
        %v449 = vpack.c.b16 %v389, %v387
        %v450 = vpack.c.b16 %v390, %v388
        %v451 = vpack.c.b16 %v393, %v391
        %v452 = vpack.c.b16 %v394, %v392
        %v453 = vpack.c.b16 %v397, %v395
        %v454 = vpack.c.b16 %v398, %v396
        %v455 = vpack.c.b16 %v401, %v399
        %v456 = vpack.c.b16 %v402, %v400
        %v457 = vpack.c.b16 %v405, %v403
        %v458 = vpack.c.b16 %v406, %v404
        %v459 = vpack.c.b16 %v409, %v407
        %v460 = vpack.c.b16 %v410, %v408
        %v461 = vpack.c.b16 %v413, %v411
        %v462 = vpack.c.b16 %v414, %v412
        %v463 = vpack.c.b16 %v417, %v415
        %v464 = vpack.c.b16 %v418, %v416
        %v465 = vpack.c.b16 %v421, %v419
        %v466 = vpack.c.b16 %v422, %v420
        %v467 = vpack.c.b16 %v425, %v423
        %v468 = vpack.c.b16 %v426, %v424
        %v469 = vpack.c.b16 %v429, %v427
        %v470 = vpack.c.b16 %v430, %v428
        %v471 = vpack.c.b16 %v433, %v431
        %v472 = vpack.c.b16 %v434, %v432
        %v473 = vpack.c.b16 %v437, %v435
        %v474 = vpack.c.b16 %v438, %v436
        %v475 = vpack.c.b16 %v441, %v439
        %v476 = vpack.c.b16 %v442, %v440
        %v477 = vpack.c.b16 %v445, %v443
        %v478 = vpack.c.b16 %v446, %v444
        %v543 = vunpack.c.l.b16 %v319
        %v544 = vunpack.c.l.b16 %v320
        %v545 = vunpack.c.l.b16 %v321
        %v546 = vunpack.c.l.b16 %v322
        %v547 = vunpack.c.l.b16 %v323
        %v548 = vunpack.c.l.b16 %v324
        %v549 = vunpack.c.l.b16 %v325
        %v550 = vunpack.c.l.b16 %v326
        %v551 = vunpack.c.l.b16 %v327
        %v552 = vunpack.c.l.b16 %v328
        %v553 = vunpack.c.l.b16 %v329
        %v554 = vunpack.c.l.b16 %v330
        %v555 = vunpack.c.l.b16 %v331
        %v556 = vunpack.c.l.b16 %v332
        %v557 = vunpack.c.l.b16 %v333
        %v558 = vunpack.c.l.b16 %v334
        %v559 = vunpack.c.l.b16 %v335
        %v560 = vunpack.c.l.b16 %v336
        %v561 = vunpack.c.l.b16 %v337
        %v562 = vunpack.c.l.b16 %v338
        %v563 = vunpack.c.l.b16 %v339
        %v564 = vunpack.c.l.b16 %v340
        %v565 = vunpack.c.l.b16 %v341
        %v566 = vunpack.c.l.b16 %v342
        %v567 = vunpack.c.l.b16 %v343
        %v568 = vunpack.c.l.b16 %v344
        %v569 = vunpack.c.l.b16 %v345
        %v570 = vunpack.c.l.b16 %v346
        %v571 = vunpack.c.l.b16 %v347
        %v572 = vunpack.c.l.b16 %v348
        %v573 = vunpack.c.l.b16 %v349
        %v574 = vunpack.c.l.b16 %v350
        %v575 = vpack.c.b16 %v544, %v543
        %v576 = vpack.c.b16 %v546, %v545
        %v577 = vpack.c.b16 %v548, %v547
        %v578 = vpack.c.b16 %v550, %v549
        %v579 = vpack.c.b16 %v552, %v551
        %v580 = vpack.c.b16 %v554, %v553
        %v581 = vpack.c.b16 %v556, %v555
        %v582 = vpack.c.b16 %v558, %v557
        %v583 = vpack.c.b16 %v560, %v559
        %v584 = vpack.c.b16 %v562, %v561
        %v585 = vpack.c.b16 %v564, %v563
        %v586 = vpack.c.b16 %v566, %v565
        %v587 = vpack.c.b16 %v568, %v567
        %v588 = vpack.c.b16 %v570, %v569
        %v589 = vpack.c.b16 %v572, %v571
        %v590 = vpack.c.b16 %v574, %v573
        %607 = vmatpush.bf16.msra.mxu0 %v582
        %608 = vmatpush.bf16.msra.mxu0 %v581
        %609 = vmatpush.bf16.msra.mxu0 %v580
        %610 = vmatpush.bf16.msra.mxu0 %v579
        %611 = vmatpush.bf16.msra.mxu0 %v578
        %612 = vmatpush.bf16.msra.mxu0 %v577
        %613 = vmatpush.bf16.msra.mxu0 %v576
        %614 = vmatpush.bf16.msra.mxu0 %v575
        %615 = vmatmul.bf16.gmra.mxu0 %v447
        %v616 = vpop.f32.mrf.mxu0
        %v617 = vadd.f32 0.0, %v616
        %v618 = vpop.f32.mrf.mxu0
        %v619 = vadd.f32 0.0, %v618
        %620 = vmatmul.bf16.gmra.mxu0 %v449
        %v621 = vpop.f32.mrf.mxu0
        %v622 = vadd.f32 0.0, %v621
        %v623 = vpop.f32.mrf.mxu0
        %v624 = vadd.f32 0.0, %v623
        %625 = vmatmul.bf16.gmra.mxu0 %v451
        %v626 = vpop.f32.mrf.mxu0
        %v627 = vadd.f32 0.0, %v626
        %v628 = vpop.f32.mrf.mxu0
        %v629 = vadd.f32 0.0, %v628
        %630 = vmatmul.bf16.gmra.mxu0 %v453
        %v631 = vpop.f32.mrf.mxu0
        %v632 = vadd.f32 0.0, %v631
        %v633 = vpop.f32.mrf.mxu0
        %v634 = vadd.f32 0.0, %v633
        %635 = vmatmul.bf16.gmra.mxu0 %v455
        %v636 = vpop.f32.mrf.mxu0
        %v637 = vadd.f32 0.0, %v636
        %v638 = vpop.f32.mrf.mxu0
        %v639 = vadd.f32 0.0, %v638
        %640 = vmatmul.bf16.gmra.mxu0 %v457
        %v641 = vpop.f32.mrf.mxu0
        %v642 = vadd.f32 0.0, %v641
        %v643 = vpop.f32.mrf.mxu0
        %v644 = vadd.f32 0.0, %v643
        %645 = vmatmul.bf16.gmra.mxu0 %v459
        %v646 = vpop.f32.mrf.mxu0
        %v647 = vadd.f32 0.0, %v646
        %v648 = vpop.f32.mrf.mxu0
        %v649 = vadd.f32 0.0, %v648
        %650 = vmatmul.bf16.gmra.mxu0 %v461
        %v651 = vpop.f32.mrf.mxu0
        %v652 = vadd.f32 0.0, %v651
        %v653 = vpop.f32.mrf.mxu0
        %v654 = vadd.f32 0.0, %v653
        %655 = vmatmul.bf16.gmra.mxu0 %v463
        %v656 = vpop.f32.mrf.mxu0
        %v657 = vadd.f32 0.0, %v656
        %v658 = vpop.f32.mrf.mxu0
        %v659 = vadd.f32 0.0, %v658
        %660 = vmatmul.bf16.gmra.mxu0 %v465
        %v661 = vpop.f32.mrf.mxu0
        %v662 = vadd.f32 0.0, %v661
        %v663 = vpop.f32.mrf.mxu0
        %v664 = vadd.f32 0.0, %v663
        %665 = vmatmul.bf16.gmra.mxu0 %v467
        %v666 = vpop.f32.mrf.mxu0
        %v667 = vadd.f32 0.0, %v666
        %v668 = vpop.f32.mrf.mxu0
        %v669 = vadd.f32 0.0, %v668
        %670 = vmatmul.bf16.gmra.mxu0 %v469
        %v671 = vpop.f32.mrf.mxu0
        %v672 = vadd.f32 0.0, %v671
        %v673 = vpop.f32.mrf.mxu0
        %v674 = vadd.f32 0.0, %v673
        %675 = vmatmul.bf16.gmra.mxu0 %v471
        %v676 = vpop.f32.mrf.mxu0
        %v677 = vadd.f32 0.0, %v676
        %v678 = vpop.f32.mrf.mxu0
        %v679 = vadd.f32 0.0, %v678
        %680 = vmatmul.bf16.gmra.mxu0 %v473
        %v681 = vpop.f32.mrf.mxu0
        %v682 = vadd.f32 0.0, %v681
        %v683 = vpop.f32.mrf.mxu0
        %v684 = vadd.f32 0.0, %v683
        %685 = vmatmul.bf16.gmra.mxu0 %v475
        %v686 = vpop.f32.mrf.mxu0
        %v687 = vadd.f32 0.0, %v686
        %v688 = vpop.f32.mrf.mxu0
        %v689 = vadd.f32 0.0, %v688
        %690 = vmatmul.bf16.gmra.mxu0 %v477
        %v691 = vpop.f32.mrf.mxu0
        %v692 = vadd.f32 0.0, %v691
        %v693 = vpop.f32.mrf.mxu0
        %v694 = vadd.f32 0.0, %v693
        %695 = vdwg.mxu0
        %696 = vmatpush.bf16.msra.mxu0 %v590
        %697 = vmatpush.bf16.msra.mxu0 %v589
        %698 = vmatpush.bf16.msra.mxu0 %v588
        %699 = vmatpush.bf16.msra.mxu0 %v587
        %700 = vmatpush.bf16.msra.mxu0 %v586
        %701 = vmatpush.bf16.msra.mxu0 %v585
        %702 = vmatpush.bf16.msra.mxu0 %v584
        %703 = vmatpush.bf16.msra.mxu0 %v583
        %704 = vmatmul.bf16.gmra.mxu0 %v448
        %v705 = vpop.f32.mrf.mxu0
        %v706 = vadd.f32 %v617, %v705
        %v707 = vpop.f32.mrf.mxu0
        %v708 = vadd.f32 %v619, %v707
        %709 = vmatmul.bf16.gmra.mxu0 %v450
        %v710 = vpop.f32.mrf.mxu0
        %v711 = vadd.f32 %v622, %v710
        %v712 = vpop.f32.mrf.mxu0
        %v713 = vadd.f32 %v624, %v712
        %714 = vmatmul.bf16.gmra.mxu0 %v452
        %v715 = vpop.f32.mrf.mxu0
        %v716 = vadd.f32 %v627, %v715
        %v717 = vpop.f32.mrf.mxu0
        %v718 = vadd.f32 %v629, %v717
        %719 = vmatmul.bf16.gmra.mxu0 %v454
        %v720 = vpop.f32.mrf.mxu0
        %v721 = vadd.f32 %v632, %v720
        %v722 = vpop.f32.mrf.mxu0
        %v723 = vadd.f32 %v634, %v722
        %724 = vmatmul.bf16.gmra.mxu0 %v456
        %v725 = vpop.f32.mrf.mxu0
        %v726 = vadd.f32 %v637, %v725
        %v727 = vpop.f32.mrf.mxu0
        %v728 = vadd.f32 %v639, %v727
        %729 = vmatmul.bf16.gmra.mxu0 %v458
        %v730 = vpop.f32.mrf.mxu0
        %v731 = vadd.f32 %v642, %v730
        %v732 = vpop.f32.mrf.mxu0
        %v733 = vadd.f32 %v644, %v732
        %734 = vmatmul.bf16.gmra.mxu0 %v460
        %v735 = vpop.f32.mrf.mxu0
        %v736 = vadd.f32 %v647, %v735
        %v737 = vpop.f32.mrf.mxu0
        %v738 = vadd.f32 %v649, %v737
        %739 = vmatmul.bf16.gmra.mxu0 %v462
        %v740 = vpop.f32.mrf.mxu0
        %v741 = vadd.f32 %v652, %v740
        %v742 = vpop.f32.mrf.mxu0
        %v743 = vadd.f32 %v654, %v742
        %744 = vmatmul.bf16.gmra.mxu0 %v464
        %v745 = vpop.f32.mrf.mxu0
        %v746 = vadd.f32 %v657, %v745
        %v747 = vpop.f32.mrf.mxu0
        %v748 = vadd.f32 %v659, %v747
        %749 = vmatmul.bf16.gmra.mxu0 %v466
        %v750 = vpop.f32.mrf.mxu0
        %v751 = vadd.f32 %v662, %v750
        %v752 = vpop.f32.mrf.mxu0
        %v753 = vadd.f32 %v664, %v752
        %754 = vmatmul.bf16.gmra.mxu0 %v468
        %v755 = vpop.f32.mrf.mxu0
        %v756 = vadd.f32 %v667, %v755
        %v757 = vpop.f32.mrf.mxu0
        %v758 = vadd.f32 %v669, %v757
        %759 = vmatmul.bf16.gmra.mxu0 %v470
        %v760 = vpop.f32.mrf.mxu0
        %v761 = vadd.f32 %v672, %v760
        %v762 = vpop.f32.mrf.mxu0
        %v763 = vadd.f32 %v674, %v762
        %764 = vmatmul.bf16.gmra.mxu0 %v472
        %v765 = vpop.f32.mrf.mxu0
        %v766 = vadd.f32 %v677, %v765
        %v767 = vpop.f32.mrf.mxu0
        %v768 = vadd.f32 %v679, %v767
        %769 = vmatmul.bf16.gmra.mxu0 %v474
        %v770 = vpop.f32.mrf.mxu0
        %v771 = vadd.f32 %v682, %v770
        %v772 = vpop.f32.mrf.mxu0
        %v773 = vadd.f32 %v684, %v772
        %774 = vmatmul.bf16.gmra.mxu0 %v476
        %v775 = vpop.f32.mrf.mxu0
        %v776 = vadd.f32 %v687, %v775
        %v777 = vpop.f32.mrf.mxu0
        %v778 = vadd.f32 %v689, %v777
        %779 = vmatmul.bf16.gmra.mxu0 %v478
        %v780 = vpop.f32.mrf.mxu0
        %v781 = vadd.f32 %v692, %v780
        %v782 = vpop.f32.mrf.mxu0
        %v783 = vadd.f32 %v694, %v782
        %784 = vdwg.mxu0
        %v785 = vld [vmem:[%s282] sm:$0x1]
        %v787 = vperm.slane %v785, 0
        %v789 = vmul.f32 %v706, %v787
        %v790 = vmul.f32 %v708, %v787
        %v791 = vmul.f32 %v711, %v787
        %v792 = vmul.f32 %v713, %v787
        %v793 = vmul.f32 %v716, %v787
        %v794 = vmul.f32 %v718, %v787
        %v795 = vmul.f32 %v721, %v787
        %v796 = vmul.f32 %v723, %v787
        %v797 = vmul.f32 %v726, %v787
        %v798 = vmul.f32 %v728, %v787
        %v799 = vmul.f32 %v731, %v787
        %v800 = vmul.f32 %v733, %v787
        %v801 = vmul.f32 %v736, %v787
        %v802 = vmul.f32 %v738, %v787
        %v803 = vmul.f32 %v741, %v787
        %v804 = vmul.f32 %v743, %v787
        %v805 = vmul.f32 %v746, %v787
        %v806 = vmul.f32 %v748, %v787
        %v807 = vmul.f32 %v751, %v787
        %v808 = vmul.f32 %v753, %v787
        %v809 = vmul.f32 %v756, %v787
        %v810 = vmul.f32 %v758, %v787
        %v811 = vmul.f32 %v761, %v787
        %v812 = vmul.f32 %v763, %v787
        %v813 = vmul.f32 %v766, %v787
        %v814 = vmul.f32 %v768, %v787
        %v815 = vmul.f32 %v771, %v787
        %v816 = vmul.f32 %v773, %v787
        %v817 = vmul.f32 %v776, %v787
        %v818 = vmul.f32 %v778, %v787
        %v819 = vmul.f32 %v781, %v787
        %v820 = vmul.f32 %v783, %v787
        %v821 = vld [vmem:[%s285] sm:$0x1]
        %v823 = vperm.slane %v821, 0
        %v825 = vadd.f32 %v789, %v823
        %v826 = vadd.f32 %v790, %v823
        %v827 = vadd.f32 %v791, %v823
        %v828 = vadd.f32 %v792, %v823
        %v829 = vadd.f32 %v793, %v823
        %v830 = vadd.f32 %v794, %v823
        %v831 = vadd.f32 %v795, %v823
        %v832 = vadd.f32 %v796, %v823
        %v833 = vadd.f32 %v797, %v823
        %v834 = vadd.f32 %v798, %v823
        %v835 = vadd.f32 %v799, %v823
        %v836 = vadd.f32 %v800, %v823
        %v837 = vadd.f32 %v801, %v823
        %v838 = vadd.f32 %v802, %v823
        %v839 = vadd.f32 %v803, %v823
        %v840 = vadd.f32 %v804, %v823
        %v841 = vadd.f32 %v805, %v823
        %v842 = vadd.f32 %v806, %v823
        %v843 = vadd.f32 %v807, %v823
        %v844 = vadd.f32 %v808, %v823
        %v845 = vadd.f32 %v809, %v823
        %v846 = vadd.f32 %v810, %v823
        %v847 = vadd.f32 %v811, %v823
        %v848 = vadd.f32 %v812, %v823
        %v849 = vadd.f32 %v813, %v823
        %v850 = vadd.f32 %v814, %v823
        %v851 = vadd.f32 %v815, %v823
        %v852 = vadd.f32 %v816, %v823
        %v853 = vadd.f32 %v817, %v823
        %v854 = vadd.f32 %v818, %v823
        %v855 = vadd.f32 %v819, %v823
        %v856 = vadd.f32 %v820, %v823
        %v857 = vmax.f32 %v825, 0.0
        %v858 = vmax.f32 %v826, 0.0
        %v859 = vmax.f32 %v827, 0.0
        %v860 = vmax.f32 %v828, 0.0
        %v861 = vmax.f32 %v829, 0.0
        %v862 = vmax.f32 %v830, 0.0
        %v863 = vmax.f32 %v831, 0.0
        %v864 = vmax.f32 %v832, 0.0
        %v865 = vmax.f32 %v833, 0.0
        %v866 = vmax.f32 %v834, 0.0
        %v867 = vmax.f32 %v835, 0.0
        %v868 = vmax.f32 %v836, 0.0
        %v869 = vmax.f32 %v837, 0.0
        %v870 = vmax.f32 %v838, 0.0
        %v871 = vmax.f32 %v839, 0.0
        %v872 = vmax.f32 %v840, 0.0
        %v873 = vmax.f32 %v841, 0.0
        %v874 = vmax.f32 %v842, 0.0
        %v875 = vmax.f32 %v843, 0.0
        %v876 = vmax.f32 %v844, 0.0
        %v877 = vmax.f32 %v845, 0.0
        %v878 = vmax.f32 %v846, 0.0
        %v879 = vmax.f32 %v847, 0.0
        %v880 = vmax.f32 %v848, 0.0
        %v881 = vmax.f32 %v849, 0.0
        %v882 = vmax.f32 %v850, 0.0
        %v883 = vmax.f32 %v851, 0.0
        %v884 = vmax.f32 %v852, 0.0
        %v885 = vmax.f32 %v853, 0.0
        %v886 = vmax.f32 %v854, 0.0
        %v887 = vmax.f32 %v855, 0.0
        %v888 = vmax.f32 %v856, 0.0
        %v889 = vpack.c.bf16 %v857, %v857
        %v890 = vpack.c.bf16 %v858, %v858
        %v891 = vpack.c.bf16 %v859, %v859
        %v892 = vpack.c.bf16 %v860, %v860
        %v893 = vpack.c.bf16 %v861, %v861
        %v894 = vpack.c.bf16 %v862, %v862
        %v895 = vpack.c.bf16 %v863, %v863
        %v896 = vpack.c.bf16 %v864, %v864
        %v897 = vpack.c.bf16 %v865, %v865
        %v898 = vpack.c.bf16 %v866, %v866
        %v899 = vpack.c.bf16 %v867, %v867
        %v900 = vpack.c.bf16 %v868, %v868
        %v901 = vpack.c.bf16 %v869, %v869
        %v902 = vpack.c.bf16 %v870, %v870
        %v903 = vpack.c.bf16 %v871, %v871
        %v904 = vpack.c.bf16 %v872, %v872
        %v905 = vpack.c.bf16 %v873, %v873
        %v906 = vpack.c.bf16 %v874, %v874
        %v907 = vpack.c.bf16 %v875, %v875
        %v908 = vpack.c.bf16 %v876, %v876
        %v909 = vpack.c.bf16 %v877, %v877
        %v910 = vpack.c.bf16 %v878, %v878
        %v911 = vpack.c.bf16 %v879, %v879
        %v912 = vpack.c.bf16 %v880, %v880
        %v913 = vpack.c.bf16 %v881, %v881
        %v914 = vpack.c.bf16 %v882, %v882
        %v915 = vpack.c.bf16 %v883, %v883
        %v916 = vpack.c.bf16 %v884, %v884
        %v917 = vpack.c.bf16 %v885, %v885
        %v918 = vpack.c.bf16 %v886, %v886
        %v919 = vpack.c.bf16 %v887, %v887
        %v920 = vpack.c.bf16 %v888, %v888
        %921 = vst [vmem:[%s278] sm:$0xf] %v889
        %922 = vst [vmem:[%s278 + $0x4] sm:$0xf] %v890
        %923 = vst [vmem:[%s278 + $0x8] sm:$0xf] %v891
        %924 = vst [vmem:[%s278 + $0xc] sm:$0xf] %v892
        %925 = vst [vmem:[%s278 + $0x10] sm:$0xf] %v893
        %926 = vst [vmem:[%s278 + $0x14] sm:$0xf] %v894
        %927 = vst [vmem:[%s278 + $0x18] sm:$0xf] %v895
        %928 = vst [vmem:[%s278 + $0x1c] sm:$0xf] %v896
        %929 = vst [vmem:[%s278 + $0x20] sm:$0xf] %v897
        %930 = vst [vmem:[%s278 + $0x24] sm:$0xf] %v898
        %931 = vst [vmem:[%s278 + $0x28] sm:$0xf] %v899
        %932 = vst [vmem:[%s278 + $0x2c] sm:$0xf] %v900
        %933 = vst [vmem:[%s278 + $0x30] sm:$0xf] %v901
        %934 = vst [vmem:[%s278 + $0x34] sm:$0xf] %v902
        %935 = vst [vmem:[%s278 + $0x38] sm:$0xf] %v903
        %936 = vst [vmem:[%s278 + $0x3c] sm:$0xf] %v904
        %937 = vst [vmem:[%s278 + $0x40] sm:$0xf] %v905
        %938 = vst [vmem:[%s278 + $0x44] sm:$0xf] %v906
        %939 = vst [vmem:[%s278 + $0x48] sm:$0xf] %v907
        %940 = vst [vmem:[%s278 + $0x4c] sm:$0xf] %v908
        %941 = vst [vmem:[%s278 + $0x50] sm:$0xf] %v909
        %942 = vst [vmem:[%s278 + $0x54] sm:$0xf] %v910
        %943 = vst [vmem:[%s278 + $0x58] sm:$0xf] %v911
        %944 = vst [vmem:[%s278 + $0x5c] sm:$0xf] %v912
        %945 = vst [vmem:[%s278 + $0x60] sm:$0xf] %v913
        %946 = vst [vmem:[%s278 + $0x64] sm:$0xf] %v914
        %947 = vst [vmem:[%s278 + $0x68] sm:$0xf] %v915
        %948 = vst [vmem:[%s278 + $0x6c] sm:$0xf] %v916
        %949 = vst [vmem:[%s278 + $0x70] sm:$0xf] %v917
        %950 = vst [vmem:[%s278 + $0x74] sm:$0xf] %v918
        %951 = vst [vmem:[%s278 + $0x78] sm:$0xf] %v919
        %952 = vst [vmem:[%s278 + $0x7c] sm:$0xf] %v920
        %s953 = sand.u32 %s148, 1
        %s954 = scalar_lea.sflag [#allocation4], %s953
        %s955 = sand.u32 %s148, 1
        %s956 = smul.addr %s955, 128
        %s957 = scalar_lea.vmem [#allocation7], %s956
        // Predicated region
        $region45: #{tpu_custom_call.1} parent=35 // pred_check
          %p958 = pneg %p158
        $region46: #{tpu_custom_call.1} parent=35 // pred_check_branch
          %960 = sbr.rel (%p958) target = $region48
        $region47: #{tpu_custom_call.1} parent=35 // pred_region
          %s961 = smul.u32 32, %s26
          %963 = vsyncadd %s954, 0
          %s964 = sadd.s32 %s27, %s961
          %s965 = smul.addr %s964, 4
          %s966 = scalar_lea.hbm %s4, %s965
          %s967 = sshll.u32 %s957, 4
          %s968 = int_to_ptr.vmem [resolvable:$true] %s967
          %s969 = sshll.u32 %s966, 4
          %s970 = int_to_ptr.hbm [resolvable:$true] %s969
          %975 = dma.vmem_to_hbm [thread:$0]  %s968, 2048, %s970, %s954, 64, 64, 4
        $region48: #{tpu_custom_call.1} parent=35 // pred_fallthru
          _
      $region36: #{tpu_custom_call.1} parent=5 // pred_fallthru
        _
      %p976 = scmp.le.s32.totalorder 2, %s17
      // Predicated region
      $region49: #{tpu_custom_call.1} parent=5 // pred_check
        %p977 = pneg %p976
      $region50: #{tpu_custom_call.1} parent=5 // pred_check_branch
        %979 = sbr.rel (%p977) target = $region52
      $region51: #{tpu_custom_call.1} parent=5 // pred_region
        %s980 = ssub.s32 %s17, 2
        // Predicated region
        $region53: #{tpu_custom_call.1} parent=51 // pred_check
          %p981 = pneg %p164
        $region54: #{tpu_custom_call.1} parent=51 // pred_check_branch
          %983 = sbr.rel (%p981) target = $region56
        $region55: #{tpu_custom_call.1} parent=51 // pred_region
          %s984 = sand.u32 %s149, 1
          %s985 = scalar_lea.sflag [#allocation4], %s984
          %s986 = sand.u32 %s149, 1
          %s987 = smul.addr %s986, 128
          %s988 = scalar_lea.vmem [#allocation7], %s987
          %990 = dma.done %s985, 2048
        $region56: #{tpu_custom_call.1} parent=51 // pred_fallthru
          _
      $region52: #{tpu_custom_call.1} parent=5 // pred_fallthru
        _
    $region6: #{tpu_custom_call.1} parent=1 // loop_footer
      %s21 = sadd.s32 1, %s17
    $region7: #{tpu_custom_call.1} parent=1 // loop_footer_branch
      %16 = sbr.rel target = $region3
    $region8: #{tpu_custom_call.1} parent=1 // loop_exit
      _
    %991 = vsyncpa [#allocation3], 1
    %s992 = scalar_lea.sflag [#allocation3], 1
    %993 = vsyncpa %s992, 1
    %994 = vsyncpa [#allocation6], 1
    %995 = vsyncpa [#allocation4], 1
    %s996 = scalar_lea.sflag [#allocation4], 1
    %997 = vsyncpa %s996, 1

</llo_original>
